<compile_context>
chip_gen: v7x
topology: tpu7x:2x2x1
jax: 0.10.0
libtpu: 0.0.40
codegen_flags: <defaults>
</compile_context>

<pallas_src>
import math

import jax
import jax.numpy as jnp
from jax import lax
from jax.experimental import pallas as pl
from jax.experimental.pallas import tpu as pltpu


_VMEM_LIMIT_CAP = 48 * 1024 * 1024       # safe on v7x (64 MiB/TC); headroom on v5e/v6e
_STREAM_INPUT_BUDGET = 30 * 1024 * 1024  # double-buffered (bt, D) input tiles
_FUSED_VMEM_BUDGET = 36 * 1024 * 1024    # resident tables + one-hot/gather temporaries


def _round_up(x, m):
    return ((x + m - 1) // m) * m


def _clamp_tile(bt, batch):
    """Lane-multiple tile; keep >= 2 grid steps when batch allows (v7x megacore)."""
    bt = _round_up(max(min(bt, max(batch, 1)), 1), 128)
    if batch > 128:
        bt = min(bt, max(128, _round_up((batch + 1) // 2, 128)))
    return max(bt, 128)


# ----------------------------------------------------------------------------
# Streaming kernel: consumes already-gathered (B, D) rows, batch on sublanes.
# ----------------------------------------------------------------------------
def _transe_l2_rows_kernel(h_ref, r_ref, t_ref, o_ref):
    # (bt, D) f32 tiles straight from the gathered embeddings (no transpose
    # pass); the D < 128 lane fill only wastes vregs, not HBM bytes.
    diff = h_ref[...] + r_ref[...] - t_ref[...]
    o_ref[...] = jnp.sqrt(jnp.sum(diff * diff, axis=1, keepdims=True))


def transe_score(e_hs, e_rs, e_ts, *, batch_tile=8192):
    """sqrt(sum((h + r - t)^2, axis=1)) -> (B, 1) f32, streaming (bt, D) tiles."""
    B, D = e_hs.shape
    assert e_rs.shape == (B, D) and e_ts.shape == (B, D)
    f32 = jnp.float32

    # VMEM clamp: 2 buffers x 3 inputs x bt x D x 4B must fit the budget.
    max_bt = max(128, (_STREAM_INPUT_BUDGET // (2 * 3 * D * 4)) // 128 * 128)
    bt = _clamp_tile(min(batch_tile, max_bt), B)
    grid = (pl.cdiv(B, bt),)

    working = 2 * (3 * bt * D + bt) * 4 + 2 * bt * D * 4      # buffers + temporaries
    vmem_limit = min(_VMEM_LIMIT_CAP, max(32 * 1024 * 1024, working + 8 * 1024 * 1024))

    return pl.pallas_call(
        _transe_l2_rows_kernel,
        out_shape=jax.ShapeDtypeStruct((B, 1), f32),
        grid=grid,
        in_specs=[pl.BlockSpec((bt, D), lambda i: (i, 0))] * 3,
        out_specs=pl.BlockSpec((bt, 1), lambda i: (i, 0)),
        compiler_params=pltpu.CompilerParams(
            dimension_semantics=("parallel",),
            vmem_limit_bytes=vmem_limit,
        ),
    )(e_hs.astype(f32), e_rs.astype(f32), e_ts.astype(f32))


# ----------------------------------------------------------------------------
# Fused kernel: gather + (h + r - t) + L2 norm in one pass, batch on lanes.
# ----------------------------------------------------------------------------
def _transe_l2_fused_kernel(h_idx_ref, r_idx_ref, t_idx_ref, ent_t_ref, rel_t_ref,
                            o_ref):
    # ent_t_ref: (D, E) f32, rel_t_ref: (D, R) f32 (VMEM-resident tables).
    # idx refs: (1, bt) int32, lane-dense.  Gather = one-hot matmul on the MXU,
    # so the gathered (B, D) embeddings never round-trip through HBM.
    ent_t = ent_t_ref[...]
    rel_t = rel_t_ref[...]

    def gather_t(table_t, idx_row):                      # -> (D, bt)
        n = table_t.shape[1]
        rows = lax.broadcasted_iota(jnp.int32, (n, idx_row.shape[-1]), 0)
        onehot = (rows == idx_row).astype(jnp.float32)   # (n, bt)
        return jnp.dot(table_t, onehot, preferred_element_type=jnp.float32)

    e_h = gather_t(ent_t, h_idx_ref[...])
    e_r = gather_t(rel_t, r_idx_ref[...])
    e_t = gather_t(ent_t, t_idx_ref[...])
    diff = e_h + e_r - e_t                               # (D, bt)
    o_ref[...] = jnp.sqrt(jnp.sum(diff * diff, axis=0, keepdims=True))


def _can_fuse(num_ent, num_rel, emb_dim):
    if max(num_ent, num_rel) > 2048 or emb_dim > 512:
        return False
    table_bytes = 2 * (num_ent + num_rel) * emb_dim * 4
    per_col = 4 * (3 * max(num_ent, num_rel, 8) + 6 * emb_dim + 8)
    return (_FUSED_VMEM_BUDGET - table_bytes) >= 128 * per_col


def transe_score_fused(ent_embs, rel_embs, hs, rs, ts, *, batch_tile=4096):
    """Fully fused TransE L2 score (gather + distance) for small tables."""
    E, D = ent_embs.shape
    R, _ = rel_embs.shape
    B = int(hs.shape[0])
    f32 = jnp.float32

    ent_t = jnp.transpose(ent_embs.astype(f32))          # (D, E), tiny, VMEM-resident
    rel_t = jnp.transpose(rel_embs.astype(f32))          # (D, R)

    # VMEM accounting: double-buffered tables + per-column one-hot / gathered
    # embedding temporaries.
    n_max = max(E, R, 8)
    table_bytes = 2 * (E + R) * D * 4
    per_col = 4 * (3 * n_max + 6 * D + 8)
    avail = max(_FUSED_VMEM_BUDGET - table_bytes, 128 * per_col)
    max_bt = max(128, (avail // per_col) // 128 * 128)
    bt = _clamp_tile(min(batch_tile, max_bt), B)
    grid = (pl.cdiv(B, bt),)

    vmem_limit = min(_VMEM_LIMIT_CAP,
                     max(32 * 1024 * 1024, table_bytes + bt * per_col + 8 * 1024 * 1024))

    idx_spec = pl.BlockSpec((1, bt), lambda i: (0, i))
    out = pl.pallas_call(
        _transe_l2_fused_kernel,
        out_shape=jax.ShapeDtypeStruct((1, B), f32),
        grid=grid,
        in_specs=[idx_spec, idx_spec, idx_spec,
                  pl.BlockSpec((D, E), lambda i: (0, 0)),   # whole table, DMA'd once
                  pl.BlockSpec((D, R), lambda i: (0, 0))],
        out_specs=pl.BlockSpec((1, bt), lambda i: (0, i)),  # lane-dense output slab
        compiler_params=pltpu.CompilerParams(
            dimension_semantics=("parallel",),
            vmem_limit_bytes=vmem_limit,
        ),
    )(hs.reshape(1, B).astype(jnp.int32),
      rs.reshape(1, B).astype(jnp.int32),
      ts.reshape(1, B).astype(jnp.int32),
      ent_t, rel_t)
    return out.reshape(B, 1)


# ----------------------------------------------------------------------------
# Module port
# ----------------------------------------------------------------------------
class TransEPallas:
    """JAX/Pallas port of the TransE module forward pass (L2 distance)."""

    def __init__(self, num_ent, num_rel, emb_dim, key, margin=5.0):
        self.num_ent = num_ent
        self.num_rel = num_rel
        self.emb_dim = emb_dim
        self.gamma = margin
        sqrt_size = 6.0 / math.sqrt(emb_dim)
        k_ent, k_rel = jax.random.split(key)
        # nn.init.uniform_(weight, -sqrt_size, sqrt_size)
        self.ent_embs = jax.random.uniform(
            k_ent, (num_ent, emb_dim), jnp.float32, -sqrt_size, sqrt_size)
        self.rel_embs = jax.random.uniform(
            k_rel, (num_rel, emb_dim), jnp.float32, -sqrt_size, sqrt_size)
        self._fused = _can_fuse(num_ent, num_rel, emb_dim)

    def forward(self, hs, rs, ts):
        if self._fused:
            # Single streaming pass: gather fused into the kernel.
            return transe_score_fused(self.ent_embs, self.rel_embs, hs, rs, ts)
        # Large tables: XLA gather (glue) + streaming distance kernel.
        e_hs = jnp.take(self.ent_embs, hs, axis=0)
        e_rs = jnp.take(self.rel_embs, rs, axis=0)
        e_ts = jnp.take(self.ent_embs, ts, axis=0)
        return transe_score(e_hs, e_rs, e_ts)

    def predict(self, hs, rs, ts):
        return self.forward(hs, rs, ts)


if __name__ == "__main__":
    num_ent, num_rel, emb_dim = 50, 11, 32

    key = jax.random.PRNGKey(0)
    k_model, k_data = jax.random.split(key)
    model = TransEPallas(num_ent, num_rel, emb_dim, k_model, margin=5.0)

    def reference(hs, rs, ts):
        e_hs = jnp.take(model.ent_embs, hs, axis=0)
        e_rs = jnp.take(model.rel_embs, rs, axis=0)
        e_ts = jnp.take(model.ent_embs, ts, axis=0)
        return jnp.sqrt(jnp.sum((e_hs + e_rs - e_ts) ** 2, axis=1)).reshape(-1, 1)

    for batch in (8, 300):   # tiny case + multi-tile / partial-block case
        kh, kr, kt = jax.random.split(jax.random.fold_in(k_data, batch), 3)
        hs = jax.random.randint(kh, (batch,), 0, num_ent, dtype=jnp.int32)
        rs = jax.random.randint(kr, (batch,), 0, num_rel, dtype=jnp.int32)
        ts = jax.random.randint(kt, (batch,), 0, num_ent, dtype=jnp.int32)

        # Fused path (this is what model.forward uses at this table size).
        out_fused = jax.block_until_ready(model.forward(hs, rs, ts))

        # Streaming fallback path, exercised explicitly as well.
        e_hs = jnp.take(model.ent_embs, hs, axis=0)
        e_rs = jnp.take(model.rel_embs, rs, axis=0)
        e_ts = jnp.take(model.ent_embs, ts, axis=0)
        out_stream = jax.block_until_ready(transe_score(e_hs, e_rs, e_ts))

        ref = reference(hs, rs, ts)
        assert out_fused.shape == (batch, 1), out_fused.shape
        assert out_stream.shape == (batch, 1), out_stream.shape
        assert jnp.allclose(out_fused, ref, atol=1e-4, rtol=1e-5)
        assert jnp.allclose(out_stream, ref, atol=1e-4, rtol=1e-5)

    print("KERNEL_OK")
</pallas_src>

<mosaic_0001>
module attributes {stable_mosaic.version = 11 : i64} {
  func.func @_transe_l2_fused_kernel(%arg0: i32, %arg1: memref<1x128xi32, #tpu.memory_space<vmem>>, %arg2: memref<1x128xi32, #tpu.memory_space<vmem>>, %arg3: memref<1x128xi32, #tpu.memory_space<vmem>>, %arg4: memref<32x50xf32, #tpu.memory_space<vmem>>, %arg5: memref<32x11xf32, #tpu.memory_space<vmem>>, %arg6: memref<1x128xf32, #tpu.memory_space<vmem>>) attributes {dimension_semantics = [#tpu.dimension_semantics<parallel>], iteration_bounds = array<i64: 1>, scalar_prefetch = 0 : i64, scratch_operands = 0 : i64, tpu.core_type = #tpu.core_type<tc>, window_params = [{transform_indices = @transform_0, window_bounds = array<i64: 1, 128>}, {transform_indices = @transform_1, window_bounds = array<i64: 1, 128>}, {transform_indices = @transform_2, window_bounds = array<i64: 1, 128>}, {pipeline_mode = #tpu.pipeline_mode<synchronous>, transform_indices = @transform_3, window_bounds = array<i64: 32, 50>}, {pipeline_mode = #tpu.pipeline_mode<synchronous>, transform_indices = @transform_4, window_bounds = array<i64: 32, 11>}, {transform_indices = @transform_5, window_bounds = array<i64: 1, 128>}]} {
    %c0 = arith.constant 0 : index
    %c0_0 = arith.constant 0 : index
    %0 = vector.load %arg4[%c0, %c0_0] : memref<32x50xf32, #tpu.memory_space<vmem>>, vector<32x50xf32>
    %c0_1 = arith.constant 0 : index
    %c0_2 = arith.constant 0 : index
    %1 = vector.load %arg5[%c0_1, %c0_2] : memref<32x11xf32, #tpu.memory_space<vmem>>, vector<32x11xf32>
    %c0_3 = arith.constant 0 : index
    %c0_4 = arith.constant 0 : index
    %2 = vector.load %arg1[%c0_3, %c0_4] : memref<1x128xi32, #tpu.memory_space<vmem>>, vector<1x128xi32>
    %3 = tpu.iota {dimensions = array<i32: 0>} : vector<50x128xi32>
    %4 = vector.broadcast %2 : vector<1x128xi32> to vector<50x128xi32>
    %5 = arith.cmpi eq, %3, %4 : vector<50x128xi32>
    %6 = arith.extui %5 : vector<50x128xi1> to vector<50x128xi32>
    %7 = arith.sitofp %6 : vector<50x128xi32> to vector<50x128xf32>
    %cst = arith.constant dense<0.000000e+00> : vector<32x128xf32>
    %8 = tpu.matmul %0, %7, %cst {dimension_numbers = #tpu.dot_dimension_numbers<[1], [0], [0], [1], [0, 0, 1, 1], [], []>} : vector<32x50xf32>, vector<50x128xf32>, vector<32x128xf32> -> vector<32x128xf32>
    %c0_5 = arith.constant 0 : index
    %c0_6 = arith.constant 0 : index
    %9 = vector.load %arg2[%c0_5, %c0_6] : memref<1x128xi32, #tpu.memory_space<vmem>>, vector<1x128xi32>
    %10 = tpu.iota {dimensions = array<i32: 0>} : vector<11x128xi32>
    %11 = vector.broadcast %9 : vector<1x128xi32> to vector<11x128xi32>
    %12 = arith.cmpi eq, %10, %11 : vector<11x128xi32>
    %13 = arith.extui %12 : vector<11x128xi1> to vector<11x128xi32>
    %14 = arith.sitofp %13 : vector<11x128xi32> to vector<11x128xf32>
    %cst_7 = arith.constant dense<0.000000e+00> : vector<32x128xf32>
    %15 = tpu.matmul %1, %14, %cst_7 {dimension_numbers = #tpu.dot_dimension_numbers<[1], [0], [0], [1], [0, 0, 1, 1], [], []>} : vector<32x11xf32>, vector<11x128xf32>, vector<32x128xf32> -> vector<32x128xf32>
    %c0_8 = arith.constant 0 : index
    %c0_9 = arith.constant 0 : index
    %16 = vector.load %arg3[%c0_8, %c0_9] : memref<1x128xi32, #tpu.memory_space<vmem>>, vector<1x128xi32>
    %17 = tpu.iota {dimensions = array<i32: 0>} : vector<50x128xi32>
    %18 = vector.broadcast %16 : vector<1x128xi32> to vector<50x128xi32>
    %19 = arith.cmpi eq, %17, %18 : vector<50x128xi32>
    %20 = arith.extui %19 : vector<50x128xi1> to vector<50x128xi32>
    %21 = arith.sitofp %20 : vector<50x128xi32> to vector<50x128xf32>
    %cst_10 = arith.constant dense<0.000000e+00> : vector<32x128xf32>
    %22 = tpu.matmul %0, %21, %cst_10 {dimension_numbers = #tpu.dot_dimension_numbers<[1], [0], [0], [1], [0, 0, 1, 1], [], []>} : vector<32x50xf32>, vector<50x128xf32>, vector<32x128xf32> -> vector<32x128xf32>
    %23 = arith.addf %8, %15 : vector<32x128xf32>
    %24 = arith.subf %23, %22 : vector<32x128xf32>
    %25 = arith.mulf %24, %24 : vector<32x128xf32>
    %cst_11 = arith.constant dense<0.000000e+00> : vector<128xf32>
    %26 = vector.multi_reduction <add>, %25, %cst_11 [0] : vector<32x128xf32> to vector<128xf32>
    %27 = vector.shape_cast %26 : vector<128xf32> to vector<1x128xf32>
    %28 = math.sqrt %27 : vector<1x128xf32>
    %c0_12 = arith.constant 0 : index
    %c0_13 = arith.constant 0 : index
    %29 = vector.load %arg6[%c0_12, %c0_13] : memref<1x128xf32, #tpu.memory_space<vmem>>, vector<1x128xf32>
    tpu.vector_store %arg6[%c0_12, %c0_13], %28 {strides = array<i32>} : memref<1x128xf32, #tpu.memory_space<vmem>>, vector<1x128xf32>,
    return
  }
  func.func @transform_0(%arg0: i32) -> (i32, i32) {
    %c0_i32 = arith.constant 0 : i32
    %c0_i32_0 = arith.constant 0 : i32
    return %c0_i32, %arg0 : i32, i32
  }
  func.func @transform_1(%arg0: i32) -> (i32, i32) {
    %c0_i32 = arith.constant 0 : i32
    %c0_i32_0 = arith.constant 0 : i32
    return %c0_i32, %arg0 : i32, i32
  }
  func.func @transform_2(%arg0: i32) -> (i32, i32) {
    %c0_i32 = arith.constant 0 : i32
    %c0_i32_0 = arith.constant 0 : i32
    return %c0_i32, %arg0 : i32, i32
  }
  func.func @transform_3(%arg0: i32) -> (i32, i32) {
    %c0_i32 = arith.constant 0 : i32
    %c0_i32_0 = arith.constant 0 : i32
    %c0_i32_1 = arith.constant 0 : i32
    return %c0_i32, %c0_i32_0 : i32, i32
  }
  func.func @transform_4(%arg0: i32) -> (i32, i32) {
    %c0_i32 = arith.constant 0 : i32
    %c0_i32_0 = arith.constant 0 : i32
    %c0_i32_1 = arith.constant 0 : i32
    return %c0_i32, %c0_i32_0 : i32, i32
  }
  func.func @transform_5(%arg0: i32) -> (i32, i32) {
    %c0_i32 = arith.constant 0 : i32
    %c0_i32_0 = arith.constant 0 : i32
    return %c0_i32, %arg0 : i32, i32
  }
}

</mosaic_0001>

<llo_original>
// kernel: tpu_custom_call.1
$region0: #{tpu_custom_call.1}
  #allocation0 [shape = 'u32[]', space=smem, size = 0x4, offset = 0x4, fixed_abs, tag = 'smem constant byte address 0x4 - core index']
  #allocation1 [shape = 'u32[144,128]{1,0:T(1,128)}', space=vmem, size = 0x12000, scoped, tag = 'internal scratch']
  %s0 = inlined_call_operand.vmem [shape: s32[1,8], index: 0, kind: input, shape index: {}]
  %s1 = inlined_call_operand.vmem [shape: s32[1,8], index: 1, kind: input, shape index: {}]
  %s2 = inlined_call_operand.vmem [shape: s32[1,8], index: 2, kind: input, shape index: {}]
  %s3 = inlined_call_operand.vmem [shape: f32[32,50], index: 3, kind: input, shape index: {}]
  %s4 = inlined_call_operand.vmem [shape: f32[32,11], index: 4, kind: input, shape index: {}]
  %s5 = inlined_call_operand.hbm [shape: f32[1,8], index: 5, kind: output, shape index: {}]
  %s6 = sld [smem:[#allocation0]]
  $region30: #{tpu_custom_call.1} parent=0
    _
  %s8 = ssub.s32 1, %s6
  %s9 = scalar_select 0, %s8, %s6
  $region1: #{tpu_custom_call.1} parent=0
    #allocation2 [shape = 'u8[512]{0}', space=vmem, size = 0x400, scoped, tag = 'output window, operand 0, single buffered']
    #allocation3 [shape = 's32[1]{0}', space=sflag, size = 0x4, scoped, tag = 'scoped memory for tpu_custom_call.1']
    %10 = vsyncpa [#allocation3], 0
    // Predicated region
    $region2: #{tpu_custom_call.1} parent=1 // pred_check
      _
    $region3: #{tpu_custom_call.1} parent=1 // pred_check_branch
      %12 = sbr.rel (0) target = $region5
    $region4: #{tpu_custom_call.1} parent=1 // pred_region
      _
    $region5: #{tpu_custom_call.1} parent=1 // pred_fallthru
      _
    // Predicated region
    $region6: #{tpu_custom_call.1} parent=1 // pred_check
      _
    $region7: #{tpu_custom_call.1} parent=1 // pred_check_branch
      %14 = sbr.rel (0) target = $region9
    $region8: #{tpu_custom_call.1} parent=1 // pred_region
      _
    $region9: #{tpu_custom_call.1} parent=1 // pred_fallthru
      _
    // Predicated region
    $region10: #{tpu_custom_call.1} parent=1 // pred_check
      _
    $region11: #{tpu_custom_call.1} parent=1 // pred_check_branch
      %16 = sbr.rel (0) target = $region13
    $region12: #{tpu_custom_call.1} parent=1 // pred_region
      _
    $region13: #{tpu_custom_call.1} parent=1 // pred_fallthru
      _
    // Predicated region
    $region14: #{tpu_custom_call.1} parent=1 // pred_check
      _
    $region15: #{tpu_custom_call.1} parent=1 // pred_check_branch
      %18 = sbr.rel (0) target = $region17
    $region16: #{tpu_custom_call.1} parent=1 // pred_region
      _
    $region17: #{tpu_custom_call.1} parent=1 // pred_fallthru
      _
    // Predicated region
    $region18: #{tpu_custom_call.1} parent=1 // pred_check
      _
    $region19: #{tpu_custom_call.1} parent=1 // pred_check_branch
      %20 = sbr.rel (0) target = $region21
    $region20: #{tpu_custom_call.1} parent=1 // pred_region
      _
    $region21: #{tpu_custom_call.1} parent=1 // pred_fallthru
      _
    %v21 = vld [vmem:[%s3] sm:$0xff]
    %v22 = vld [vmem:[%s3 + $0x8] sm:$0xff]
    %v23 = vld [vmem:[%s3 + $0x10] sm:$0xff]
    %v24 = vld [vmem:[%s3 + $0x18] sm:$0xff]
    %v25 = vld [vmem:[%s4] sm:$0xff]
    %v26 = vld [vmem:[%s4 + $0x8] sm:$0xff]
    %v27 = vld [vmem:[%s4 + $0x10] sm:$0xff]
    %v28 = vld [vmem:[%s4 + $0x18] sm:$0xff]
    %v29 = vld [vmem:[%s0] sm:$0x1]
    %v30 = vlaneseq
    %v31 = vshrl.u32 %v30, 7
    %v32 = vadd.s32 %v31, 8
    %v33 = vadd.s32 %v31, 16
    %v34 = vadd.s32 %v31, 24
    %v35 = vadd.s32 %v31, 32
    %v36 = vadd.s32 %v31, 40
    %v37 = vadd.s32 %v31, 48
    %v38 = vlaneseq
    %v39 = vshrl.u32 %v38, 7
    %v40 = vsub.s32 0, %v39
    %v41 = vrot.slane %v29, %v40
    %vm42 = vcmp.eq.s32.totalorder %v31, %v41
    %vm43 = vcmp.eq.s32.totalorder %v32, %v41
    %vm44 = vcmp.eq.s32.totalorder %v33, %v41
    %vm45 = vcmp.eq.s32.totalorder %v34, %v41
    %vm46 = vcmp.eq.s32.totalorder %v35, %v41
    %vm47 = vcmp.eq.s32.totalorder %v36, %v41
    %vm48 = vcmp.eq.s32.totalorder %v37, %v41
    %v49 = vsel %vm42, 1, 0
    %v50 = vsel %vm43, 1, 0
    %v51 = vsel %vm44, 1, 0
    %v52 = vsel %vm45, 1, 0
    %v53 = vsel %vm46, 1, 0
    %v54 = vsel %vm47, 1, 0
    %v55 = vsel %vm48, 1, 0
    %v56 = vcvt.s32.f32 %v49
    %v57 = vcvt.s32.f32 %v50
    %v58 = vcvt.s32.f32 %v51
    %v59 = vcvt.s32.f32 %v52
    %v60 = vcvt.s32.f32 %v53
    %v61 = vcvt.s32.f32 %v54
    %v62 = vcvt.s32.f32 %v55
    %v63 = vld [vmem:[%s1] sm:$0x1]
    %v64 = vlaneseq
    %v65 = vshrl.u32 %v64, 7
    %v66 = vsub.s32 0, %v65
    %v67 = vrot.slane %v63, %v66
    %vm68 = vcmp.eq.s32.totalorder %v31, %v67
    %vm69 = vcmp.eq.s32.totalorder %v32, %v67
    %v70 = vsel %vm68, 1, 0
    %v71 = vsel %vm69, 1, 0
    %v72 = vcvt.s32.f32 %v70
    %v73 = vcvt.s32.f32 %v71
    %vm74 = vcmask 89088
    %v76 = vsel %vm74, %v25, 0
    %v79 = vsel %vm74, %v26, 0
    %v82 = vsel %vm74, %v27, 0
    %v85 = vsel %vm74, %v28, 0
    %vm87 = vcmask 1042432
    %v89 = vsel %vm87, %v73, 0
    %91 = vmatprep.subr.mxu0 0.0
    %92 = vmatpush1.msra.mxu0 %v72
    %93 = vmatprep.subr.mxu0 0.0
    %94 = vmatpush1.msra.mxu0 %v89
    %95 = vmatprep.subr.mxu0 0.0
    %96 = vmatpush1.msra.mxu0 0.0
    %97 = vmatprep.subr.mxu0 0.0
    %98 = vmatpush1.msra.mxu0 0.0
    %99 = vmatprep.subr.mxu0 0.0
    %100 = vmatpush1.msra.mxu0 0.0
    %101 = vmatprep.subr.mxu0 0.0
    %102 = vmatpush1.msra.mxu0 0.0
    %103 = vmatprep.subr.mxu0 0.0
    %104 = vmatpush1.msra.mxu0 0.0
    %105 = vmatprep.subr.mxu0 0.0
    %106 = vmatpush1.msra.mxu0 0.0
    %107 = vmatprep.subr.mxu0 0.0
    %108 = vmatpush1.msra.mxu0 0.0
    %109 = vmatprep.subr.mxu0 0.0
    %110 = vmatpush1.msra.mxu0 0.0
    %111 = vmatprep.subr.mxu0 0.0
    %112 = vmatpush1.msra.mxu0 0.0
    %113 = vmatprep.subr.mxu0 0.0
    %114 = vmatpush1.msra.mxu0 0.0
    %115 = vmatprep.subr.mxu0 0.0
    %116 = vmatpush1.msra.mxu0 0.0
    %117 = vmatprep.subr.mxu0 0.0
    %118 = vmatpush1.msra.mxu0 0.0
    %119 = vmatprep.subr.mxu0 0.0
    %120 = vmatpush1.msra.mxu0 0.0
    %121 = vmatprep.subr.mxu0 0.0
    %122 = vmatpush1.msra.mxu0 0.0
    %123 = vmatprep.subr.mxu0 0.0
    %124 = vmatpush1.msra.mxu0 0.0
    %125 = vmatprep.subr.mxu0 0.0
    %126 = vmatpush1.msra.mxu0 0.0
    %127 = vmatprep.subr.mxu0 0.0
    %128 = vmatpush1.msra.mxu0 0.0
    %129 = vmatprep.subr.mxu0 0.0
    %130 = vmatpush1.msra.mxu0 0.0
    %131 = vmatprep.subr.mxu0 0.0
    %132 = vmatpush1.msra.mxu0 0.0
    %133 = vmatprep.subr.mxu0 0.0
    %134 = vmatpush1.msra.mxu0 0.0
    %135 = vmatprep.subr.mxu0 0.0
    %136 = vmatpush1.msra.mxu0 0.0
    %137 = vmatprep.subr.mxu0 0.0
    %138 = vmatpush1.msra.mxu0 0.0
    %139 = vmatprep.subr.mxu0 0.0
    %140 = vmatpush1.msra.mxu0 0.0
    %141 = vmatprep.subr.mxu0 0.0
    %142 = vmatpush1.msra.mxu0 0.0
    %143 = vmatprep.subr.mxu0 0.0
    %144 = vmatpush1.msra.mxu0 0.0
    %145 = vmatprep.subr.mxu0 0.0
    %146 = vmatpush1.msra.mxu0 0.0
    %147 = vmatprep.subr.mxu0 0.0
    %148 = vmatpush1.msra.mxu0 0.0
    %149 = vmatprep.subr.mxu0 0.0
    %150 = vmatpush1.msra.mxu0 0.0
    %151 = vmatprep.subr.mxu0 0.0
    %152 = vmatpush1.msra.mxu0 0.0
    %153 = vmatprep.subr.mxu0 0.0
    %154 = vmatpush1.msra.mxu0 0.0
    %155 = vmatprep.mubr.f32.mxu0 0.0
    %156 = vmatmul.mubr.f32.gmra.mrb[0].mxu0 %v76
    %v157 = vpop.f32.mrb[0].mxu0
    %v158 = vadd.f32 0.0, %v157
    %v159 = vpop.f32.mrb[0].mxu0
    %160 = vmatprep.mubr.f32.mxu0 0.0
    %161 = vmatmul.mubr.f32.gmra.mrb[0].mxu0 %v79
    %v162 = vpop.f32.mrb[0].mxu0
    %v163 = vadd.f32 0.0, %v162
    %v164 = vpop.f32.mrb[0].mxu0
    %165 = vmatprep.mubr.f32.mxu0 0.0
    %166 = vmatmul.mubr.f32.gmra.mrb[0].mxu0 %v82
    %v167 = vpop.f32.mrb[0].mxu0
    %v168 = vadd.f32 0.0, %v167
    %v169 = vpop.f32.mrb[0].mxu0
    %170 = vmatprep.mubr.f32.mxu0 0.0
    %171 = vmatmul.mubr.f32.gmra.mrb[0].mxu0 %v85
    %v172 = vpop.f32.mrb[0].mxu0
    %v173 = vadd.f32 0.0, %v172
    %v174 = vpop.f32.mrb[0].mxu0
    %175 = vdwg.mxu0
    %v176 = vld [vmem:[%s2] sm:$0x1]
    %v177 = vlaneseq
    %v178 = vshrl.u32 %v177, 7
    %v179 = vsub.s32 0, %v178
    %v180 = vrot.slane %v176, %v179
    %vm181 = vcmp.eq.s32.totalorder %v31, %v180
    %vm182 = vcmp.eq.s32.totalorder %v32, %v180
    %vm183 = vcmp.eq.s32.totalorder %v33, %v180
    %vm184 = vcmp.eq.s32.totalorder %v34, %v180
    %vm185 = vcmp.eq.s32.totalorder %v35, %v180
    %vm186 = vcmp.eq.s32.totalorder %v36, %v180
    %vm187 = vcmp.eq.s32.totalorder %v37, %v180
    %v188 = vsel %vm181, 1, 0
    %v189 = vsel %vm182, 1, 0
    %v190 = vsel %vm183, 1, 0
    %v191 = vsel %vm184, 1, 0
    %v192 = vsel %vm185, 1, 0
    %v193 = vsel %vm186, 1, 0
    %v194 = vsel %vm187, 1, 0
    %v195 = vcvt.s32.f32 %v188
    %v196 = vcvt.s32.f32 %v189
    %v197 = vcvt.s32.f32 %v190
    %v198 = vcvt.s32.f32 %v191
    %v199 = vcvt.s32.f32 %v192
    %v200 = vcvt.s32.f32 %v193
    %v201 = vcvt.s32.f32 %v194
    %vm202 = vcmask 408576
    %v204 = vsel %vm202, %v21, 0
    %v207 = vsel %vm202, %v22, 0
    %v210 = vsel %vm202, %v23, 0
    %v213 = vsel %vm202, %v24, 0
    %vm215 = vcmask 1041408
    %v217 = vsel %vm215, %v201, 0
    %219 = vmatprep.subr.mxu0 0.0
    %220 = vmatpush1.msra.mxu0 %v195
    %221 = vmatprep.subr.mxu0 0.0
    %222 = vmatpush1.msra.mxu0 %v196
    %223 = vmatprep.subr.mxu0 0.0
    %224 = vmatpush1.msra.mxu0 %v197
    %225 = vmatprep.subr.mxu0 0.0
    %226 = vmatpush1.msra.mxu0 %v198
    %227 = vmatprep.subr.mxu0 0.0
    %228 = vmatpush1.msra.mxu0 %v199
    %229 = vmatprep.subr.mxu0 0.0
    %230 = vmatpush1.msra.mxu0 %v200
    %231 = vmatprep.subr.mxu0 0.0
    %232 = vmatpush1.msra.mxu0 %v217
    %233 = vmatprep.subr.mxu0 0.0
    %234 = vmatpush1.msra.mxu0 0.0
    %235 = vmatprep.subr.mxu0 0.0
    %236 = vmatpush1.msra.mxu0 0.0
    %237 = vmatprep.subr.mxu0 0.0
    %238 = vmatpush1.msra.mxu0 0.0
    %239 = vmatprep.subr.mxu0 0.0
    %240 = vmatpush1.msra.mxu0 0.0
    %241 = vmatprep.subr.mxu0 0.0
    %242 = vmatpush1.msra.mxu0 0.0
    %243 = vmatprep.subr.mxu0 0.0
    %244 = vmatpush1.msra.mxu0 0.0
    %245 = vmatprep.subr.mxu0 0.0
    %246 = vmatpush1.msra.mxu0 0.0
    %247 = vmatprep.subr.mxu0 0.0
    %248 = vmatpush1.msra.mxu0 0.0
    %249 = vmatprep.subr.mxu0 0.0
    %250 = vmatpush1.msra.mxu0 0.0
    %251 = vmatprep.subr.mxu0 0.0
    %252 = vmatpush1.msra.mxu0 0.0
    %253 = vmatprep.subr.mxu0 0.0
    %254 = vmatpush1.msra.mxu0 0.0
    %255 = vmatprep.subr.mxu0 0.0
    %256 = vmatpush1.msra.mxu0 0.0
    %257 = vmatprep.subr.mxu0 0.0
    %258 = vmatpush1.msra.mxu0 0.0
    %259 = vmatprep.subr.mxu0 0.0
    %260 = vmatpush1.msra.mxu0 0.0
    %261 = vmatprep.subr.mxu0 0.0
    %262 = vmatpush1.msra.mxu0 0.0
    %263 = vmatprep.subr.mxu0 0.0
    %264 = vmatpush1.msra.mxu0 0.0
    %265 = vmatprep.subr.mxu0 0.0
    %266 = vmatpush1.msra.mxu0 0.0
    %267 = vmatprep.subr.mxu0 0.0
    %268 = vmatpush1.msra.mxu0 0.0
    %269 = vmatprep.subr.mxu0 0.0
    %270 = vmatpush1.msra.mxu0 0.0
    %271 = vmatprep.subr.mxu0 0.0
    %272 = vmatpush1.msra.mxu0 0.0
    %273 = vmatprep.subr.mxu0 0.0
    %274 = vmatpush1.msra.mxu0 0.0
    %275 = vmatprep.subr.mxu0 0.0
    %276 = vmatpush1.msra.mxu0 0.0
    %277 = vmatprep.subr.mxu0 0.0
    %278 = vmatpush1.msra.mxu0 0.0
    %279 = vmatprep.subr.mxu0 0.0
    %280 = vmatpush1.msra.mxu0 0.0
    %281 = vmatprep.subr.mxu0 0.0
    %282 = vmatpush1.msra.mxu0 0.0
    %283 = vmatprep.mubr.f32.mxu0 0.0
    %284 = vmatmul.mubr.f32.gmra.mrb[0].mxu0 %v204
    %v285 = vpop.f32.mrb[0].mxu0
    %v286 = vadd.f32 0.0, %v285
    %v287 = vpop.f32.mrb[0].mxu0
    %288 = vmatprep.mubr.f32.mxu0 0.0
    %289 = vmatmul.mubr.f32.gmra.mrb[0].mxu0 %v207
    %v290 = vpop.f32.mrb[0].mxu0
    %v291 = vadd.f32 0.0, %v290
    %v292 = vpop.f32.mrb[0].mxu0
    %293 = vmatprep.mubr.f32.mxu0 0.0
    %294 = vmatmul.mubr.f32.gmra.mrb[0].mxu0 %v210
    %v295 = vpop.f32.mrb[0].mxu0
    %v296 = vadd.f32 0.0, %v295
    %v297 = vpop.f32.mrb[0].mxu0
    %298 = vmatprep.mubr.f32.mxu0 0.0
    %299 = vmatmul.mubr.f32.gmra.mrb[0].mxu0 %v213
    %v300 = vpop.f32.mrb[0].mxu0
    %v301 = vadd.f32 0.0, %v300
    %v302 = vpop.f32.mrb[0].mxu0
    %303 = vdwg.mxu0
    %v305 = vsel %vm215, %v62, 0
    %307 = vmatprep.subr.mxu0 0.0
    %308 = vmatpush1.msra.mxu0 %v56
    %309 = vmatprep.subr.mxu0 0.0
    %310 = vmatpush1.msra.mxu0 %v57
    %311 = vmatprep.subr.mxu0 0.0
    %312 = vmatpush1.msra.mxu0 %v58
    %313 = vmatprep.subr.mxu0 0.0
    %314 = vmatpush1.msra.mxu0 %v59
    %315 = vmatprep.subr.mxu0 0.0
    %316 = vmatpush1.msra.mxu0 %v60
    %317 = vmatprep.subr.mxu0 0.0
    %318 = vmatpush1.msra.mxu0 %v61
    %319 = vmatprep.subr.mxu0 0.0
    %320 = vmatpush1.msra.mxu0 %v305
    %321 = vmatprep.subr.mxu0 0.0
    %322 = vmatpush1.msra.mxu0 0.0
    %323 = vmatprep.subr.mxu0 0.0
    %324 = vmatpush1.msra.mxu0 0.0
    %325 = vmatprep.subr.mxu0 0.0
    %326 = vmatpush1.msra.mxu0 0.0
    %327 = vmatprep.subr.mxu0 0.0
    %328 = vmatpush1.msra.mxu0 0.0
    %329 = vmatprep.subr.mxu0 0.0
    %330 = vmatpush1.msra.mxu0 0.0
    %331 = vmatprep.subr.mxu0 0.0
    %332 = vmatpush1.msra.mxu0 0.0
    %333 = vmatprep.subr.mxu0 0.0
    %334 = vmatpush1.msra.mxu0 0.0
    %335 = vmatprep.subr.mxu0 0.0
    %336 = vmatpush1.msra.mxu0 0.0
    %337 = vmatprep.subr.mxu0 0.0
    %338 = vmatpush1.msra.mxu0 0.0
    %339 = vmatprep.subr.mxu0 0.0
    %340 = vmatpush1.msra.mxu0 0.0
    %341 = vmatprep.subr.mxu0 0.0
    %342 = vmatpush1.msra.mxu0 0.0
    %343 = vmatprep.subr.mxu0 0.0
    %344 = vmatpush1.msra.mxu0 0.0
    %345 = vmatprep.subr.mxu0 0.0
    %346 = vmatpush1.msra.mxu0 0.0
    %347 = vmatprep.subr.mxu0 0.0
    %348 = vmatpush1.msra.mxu0 0.0
    %349 = vmatprep.subr.mxu0 0.0
    %350 = vmatpush1.msra.mxu0 0.0
    %351 = vmatprep.subr.mxu0 0.0
    %352 = vmatpush1.msra.mxu0 0.0
    %353 = vmatprep.subr.mxu0 0.0
    %354 = vmatpush1.msra.mxu0 0.0
    %355 = vmatprep.subr.mxu0 0.0
    %356 = vmatpush1.msra.mxu0 0.0
    %357 = vmatprep.subr.mxu0 0.0
    %358 = vmatpush1.msra.mxu0 0.0
    %359 = vmatprep.subr.mxu0 0.0
    %360 = vmatpush1.msra.mxu0 0.0
    %361 = vmatprep.subr.mxu0 0.0
    %362 = vmatpush1.msra.mxu0 0.0
    %363 = vmatprep.subr.mxu0 0.0
    %364 = vmatpush1.msra.mxu0 0.0
    %365 = vmatprep.subr.mxu0 0.0
    %366 = vmatpush1.msra.mxu0 0.0
    %367 = vmatprep.subr.mxu0 0.0
    %368 = vmatpush1.msra.mxu0 0.0
    %369 = vmatprep.subr.mxu0 0.0
    %370 = vmatpush1.msra.mxu0 0.0
    %371 = vmatprep.mubr.f32.mxu0 0.0
    %372 = vmatmul.mubr.f32.gmra.mrb[0].mxu0 %v204
    %v373 = vpop.f32.mrb[0].mxu0
    %v374 = vadd.f32 %v158, %v373
    %v375 = vpop.f32.mrb[0].mxu0
    %376 = vmatprep.mubr.f32.mxu0 0.0
    %377 = vmatmul.mubr.f32.gmra.mrb[0].mxu0 %v207
    %v378 = vpop.f32.mrb[0].mxu0
    %v379 = vadd.f32 %v163, %v378
    %v380 = vpop.f32.mrb[0].mxu0
    %381 = vmatprep.mubr.f32.mxu0 0.0
    %382 = vmatmul.mubr.f32.gmra.mrb[0].mxu0 %v210
    %v383 = vpop.f32.mrb[0].mxu0
    %v384 = vadd.f32 %v168, %v383
    %v385 = vpop.f32.mrb[0].mxu0
    %386 = vmatprep.mubr.f32.mxu0 0.0
    %387 = vmatmul.mubr.f32.gmra.mrb[0].mxu0 %v213
    %v388 = vpop.f32.mrb[0].mxu0
    %v389 = vadd.f32 %v173, %v388
    %v390 = vpop.f32.mrb[0].mxu0
    %391 = vdwg.mxu0
    %v392 = vsub.f32 %v374, %v286
    %v393 = vsub.f32 %v379, %v291
    %v394 = vsub.f32 %v384, %v296
    %v395 = vsub.f32 %v389, %v301
    %v396 = vmul.f32 %v392, %v392
    %v397 = vmul.f32 %v393, %v393
    %v398 = vmul.f32 %v394, %v394
    %v399 = vmul.f32 %v395, %v395
    %v400 = vadd.f32 %v396, %v397
    %v401 = vadd.f32 %v400, %v398
    %v402 = vadd.f32 %v401, %v399
    %v403 = vrot.slane %v402, 4
    %v404 = vadd.f32 %v402, %v403
    %v405 = vrot.slane %v404, 2
    %v406 = vadd.f32 %v404, %v405
    %v407 = vrot.slane %v406, 1
    %v408 = vadd.f32 %v406, %v407
    %v409 = vrsqrt.pop %v408
    %v410 = vmul.f32 %v408, %v409
    %vm411 = vcmp.eq.f32.partialorder %v408, inf
    %v412 = vsel %vm411, %v408, %v410
    %vm413 = vcmp.eq.f32.partialorder %v408, 0.0
    %v414 = vand.u32 %v408, 2147483648
    %v415 = vsel %vm413, %v414, %v412
    %416 = vst [vmem:[#allocation2] sm:$0x1] %v415
    // Predicated region
    $region22: #{tpu_custom_call.1} parent=1 // pred_check
      _
    $region23: #{tpu_custom_call.1} parent=1 // pred_check_branch
      %418 = sbr.rel (0) target = $region25
    $region24: #{tpu_custom_call.1} parent=1 // pred_region
      %s420 = ssub.s32 16, 16
      %421 = vsyncadd [#allocation3], %s420
      %s423 = sshll.u32 [#allocation2], 4
      %s424 = int_to_ptr.vmem [resolvable:$true] %s423
      %426 = dma.vmem_to_hbm [thread:$0]  %s424, 16, %s5, [#allocation3]
    $region25: #{tpu_custom_call.1} parent=1 // pred_fallthru
      _
    // Predicated region
    $region26: #{tpu_custom_call.1} parent=1 // pred_check
      _
    $region27: #{tpu_custom_call.1} parent=1 // pred_check_branch
      %428 = sbr.rel (0) target = $region29
    $region28: #{tpu_custom_call.1} parent=1 // pred_region
      %429 = dma.done [#allocation3], 16
    $region29: #{tpu_custom_call.1} parent=1 // pred_fallthru
      _
    %430 = vsyncpa [#allocation3], 1

</llo_original>
